<compile_context>
chip_gen: v7x
topology: tpu7x:2x2x1
jax: 0.10.0
libtpu: 0.0.40
codegen_flags: <defaults>
</compile_context>

<pallas_src>
import functools
import math

import jax
import jax.numpy as jnp
import numpy as np
from jax.experimental import pallas as pl
from jax.experimental.pallas import tpu as pltpu


# ------------------------------- small helpers -------------------------------

def _round_up(x, m):
    return (x + m - 1) // m * m


@functools.lru_cache(maxsize=None)
def _vmem_limit():
    # Generation-aware scoped-VMEM limit: leave ~1/8 headroom for compiler scratch.
    try:
        cap = getattr(pltpu.get_tpu_info(), "vmem_capacity_bytes", None)
        if cap:
            return max(32 << 20, min(int(cap) * 7 // 8, 112 << 20))
    except Exception:
        pass
    return 64 << 20  # safe fallback on any generation


def _layernorm(x, g, b, eps):
    mu = jnp.mean(x, axis=-1, keepdims=True)
    var = jnp.mean((x - mu) ** 2, axis=-1, keepdims=True)
    return (x - mu) * jax.lax.rsqrt(var + eps) * g + b


def _gelu_tanh(x):
    c = 0.7978845608028654  # sqrt(2/pi)
    return 0.5 * x * (1.0 + jnp.tanh(c * (x + 0.044715 * x * x * x)))


def _const_spec(shape):
    # Whole-array parameter block, constant over the grid (small params only;
    # large per-layer weights are grid-indexed in the stacked encoder kernel).
    zeros = tuple(0 for _ in shape)
    return pl.BlockSpec(shape, lambda *_: zeros)


def _row_tile(P):
    # Big lane-dense row tiles: 256 rows per step for large P (fills the MXU and
    # amortizes the ~0.35us per-grid-step overhead); whole (8-aligned) P otherwise.
    return 256 if P >= 256 else _round_up(P, 8)


# --------------------------------- kernels ------------------------------------

def _patch_embed_kernel(patches_ref, w_ref, b_ref, pos_ref, o_ref):
    # patches_ref: (1, TP, K) bf16   w_ref: (K, D) bf16
    # b_ref: (1, D) f32              pos_ref: (TP, D) f32
    y = jnp.dot(patches_ref[0], w_ref[...], preferred_element_type=jnp.float32)
    y = y + b_ref[...] + pos_ref[...]
    o_ref[0] = y.astype(o_ref.dtype)


def _encoder_stack_kernel(x_ref, ln1g_ref, ln1b_ref, wqkv_ref, bqkv_ref,
                          wo_ref, bo_ref, ln2g_ref, ln2b_ref,
                          w1_ref, b1_ref, w2_ref, b2_ref,
                          o_ref, ctx_ref, *, num_heads, eps):
    """One encoder layer; grid = (batch, layer).  The residual stream lives in the
    (revisited) output block, so it stays resident in VMEM across all layers while
    the per-layer weight blocks stream through double-buffered DMA."""
    l = pl.program_id(1)

    @pl.when(l == 0)
    def _():
        o_ref[...] = x_ref[...]        # seed the resident activation at layer 0

    P, D = o_ref.shape[1], o_ref.shape[2]
    dh = D // num_heads
    cdt = wqkv_ref.dtype               # bf16 MXU operand dtype

    x = o_ref[0].astype(jnp.float32)   # (P, D) residual stream, f32 math

    # ---- self-attention block ----
    resid = x
    h = _layernorm(x, ln1g_ref[0], ln1b_ref[0], eps)
    # q columns of wqkv/bqkv are pre-scaled by 1/sqrt(dh) at parameter-prep time.
    qkv = jnp.dot(h.astype(cdt), wqkv_ref[0],
                  preferred_element_type=jnp.float32) + bqkv_ref[0]   # (P, 3D) f32

    # Per-head attention: only one (P, P) score block live at a time; the head
    # context is written straight into a (P, D) VMEM scratch (no stack/concat).
    # TODO(synk): at real SigLIP sizes, flash-tile over KV inside each head.
    for hh in range(num_heads):
        lo = hh * dh
        qh = qkv[:, lo:lo + dh]
        kh = qkv[:, D + lo:D + lo + dh]
        vh = qkv[:, 2 * D + lo:2 * D + lo + dh]
        # contract the dh axis of both operands (q @ k^T without an explicit transpose)
        s = jax.lax.dot_general(qh.astype(cdt), kh.astype(cdt),
                                (((1,), (1,)), ((), ())),
                                preferred_element_type=jnp.float32)   # (P, P)
        s = s - jnp.max(s, axis=-1, keepdims=True)
        p = jnp.exp(s)
        # approx reciprocal -> EUP slot, frees the VALU during the softmax epilogue
        p = p * pl.reciprocal(jnp.sum(p, axis=-1, keepdims=True), approx=True)
        ctx_ref[:, lo:lo + dh] = jnp.dot(p.astype(cdt), vh.astype(cdt),
                                         preferred_element_type=jnp.float32)

    attn = jnp.dot(ctx_ref[...].astype(cdt), wo_ref[0],
                   preferred_element_type=jnp.float32) + bo_ref[0]
    x = attn + resid

    # ---- MLP block ----
    resid = x
    h = _layernorm(x, ln2g_ref[0], ln2b_ref[0], eps)
    h = jnp.dot(h.astype(cdt), w1_ref[0],
                preferred_element_type=jnp.float32) + b1_ref[0]
    h = _gelu_tanh(h)
    h = jnp.dot(h.astype(cdt), w2_ref[0],
                preferred_element_type=jnp.float32) + b2_ref[0]
    x = h + resid

    o_ref[0] = x.astype(o_ref.dtype)


def _post_layernorm_kernel(x_ref, g_ref, b_ref, o_ref, *, eps):
    x = x_ref[0].astype(jnp.float32)
    o_ref[0] = _layernorm(x, g_ref[...], b_ref[...], eps).astype(o_ref.dtype)


# -------------------------------- wrappers -------------------------------------

def patch_embed(patches, w, b, pos):
    """patches: (B, P, K_pad) bf16, w: (K_pad, D) bf16, b: (1, D) f32, pos: (P, D) f32."""
    B, P, K = patches.shape
    D = w.shape[1]
    TP = _row_tile(P)
    P_pad = _round_up(P, TP)
    if P_pad != P:
        patches = jnp.pad(patches, ((0, 0), (0, P_pad - P), (0, 0)))
        pos = jnp.pad(pos, ((0, P_pad - P), (0, 0)))
    out = pl.pallas_call(
        _patch_embed_kernel,
        out_shape=jax.ShapeDtypeStruct((B, P_pad, D), jnp.bfloat16),
        grid=(B, P_pad // TP),
        in_specs=[
            pl.BlockSpec((1, TP, K), lambda i, r: (i, r, 0)),
            _const_spec((K, D)),
            _const_spec((1, D)),
            pl.BlockSpec((TP, D), lambda i, r: (r, 0)),
        ],
        out_specs=pl.BlockSpec((1, TP, D), lambda i, r: (i, r, 0)),
        compiler_params=pltpu.CompilerParams(
            dimension_semantics=("parallel", "parallel"),
            vmem_limit_bytes=_vmem_limit()),
    )(patches, w, b, pos)
    return out[:, :P] if P_pad != P else out


def encoder_stack(x, sp, *, num_heads, eps):
    """Run all L encoder layers in one pallas_call.  grid=(B, L); the activation is
    resident in the output block across L while per-layer weights stream in."""
    B, P, D = x.shape
    L = sp["wqkv"].shape[0]
    I = sp["w1"].shape[2]
    kernel = functools.partial(_encoder_stack_kernel, num_heads=num_heads, eps=eps)

    def layer_spec(shape):
        # Per-layer weight slab (leading L axis), indexed by the l grid axis and
        # double-buffered by default -> layer l+1 weights prefetch behind layer l.
        return pl.BlockSpec((1,) + shape, lambda b, l: (l,) + (0,) * len(shape))

    resident = pl.BlockSpec((1, P, D), lambda b, l: (b, 0, 0))  # constant over l

    return pl.pallas_call(
        kernel,
        out_shape=jax.ShapeDtypeStruct((B, P, D), jnp.bfloat16),
        grid=(B, L),
        in_specs=[
            resident,                                   # x (consumed at l == 0 only)
            layer_spec((1, D)), layer_spec((1, D)),      # ln1 gamma/beta
            layer_spec((D, 3 * D)), layer_spec((1, 3 * D)),  # qkv proj (scale folded)
            layer_spec((D, D)), layer_spec((1, D)),      # out proj
            layer_spec((1, D)), layer_spec((1, D)),      # ln2 gamma/beta
            layer_spec((D, I)), layer_spec((1, I)),      # mlp fc1
            layer_spec((I, D)), layer_spec((1, D)),      # mlp fc2
        ],
        out_specs=resident,
        scratch_shapes=[pltpu.VMEM((P, D), jnp.float32)],   # per-head ctx repack
        compiler_params=pltpu.CompilerParams(
            dimension_semantics=("parallel", "arbitrary"),
            vmem_limit_bytes=_vmem_limit()),
    )(x, sp["ln1_g"], sp["ln1_b"], sp["wqkv"], sp["bqkv"], sp["wo"], sp["bo"],
      sp["ln2_g"], sp["ln2_b"], sp["w1"], sp["b1"], sp["w2"], sp["b2"])


def post_layernorm(x, g, b, *, eps):
    B, P, D = x.shape
    TP = _row_tile(P)
    P_pad = _round_up(P, TP)
    if P_pad != P:
        x = jnp.pad(x, ((0, 0), (0, P_pad - P), (0, 0)))
    kernel = functools.partial(_post_layernorm_kernel, eps=eps)
    # TODO(synk): emit bf16 here if the downstream consumer permits (halves writeback).
    out = pl.pallas_call(
        kernel,
        out_shape=jax.ShapeDtypeStruct((B, P_pad, D), jnp.float32),
        grid=(B, P_pad // TP),
        in_specs=[
            pl.BlockSpec((1, TP, D), lambda i, r: (i, r, 0)),
            _const_spec((1, D)), _const_spec((1, D)),
        ],
        out_specs=pl.BlockSpec((1, TP, D), lambda i, r: (i, r, 0)),
        compiler_params=pltpu.CompilerParams(
            dimension_semantics=("parallel", "parallel"),
            vmem_limit_bytes=_vmem_limit()),
    )(x, g, b)
    return out[:, :P] if P_pad != P else out


def siglip_vision_forward(images, params, config):
    """images: NCHW [B, C, H, W] f32 -> [B, num_patches, hidden] f32.
    `params` must be the *prepared* params (see prepare_params)."""
    B, C, H, W = images.shape
    ps = config["patch_size"]
    gh, gw = H // ps, W // ps
    P = gh * gw
    # conv(kernel=stride=ps, 'valid') == non-overlapping patch extraction + matmul.
    # Patches are emitted channels-last (ph, pw, c) and the contraction dim is
    # zero-padded to match the padded patch_w (multiple of 128 lanes).
    patches = images.reshape(B, C, gh, ps, gw, ps)
    patches = patches.transpose(0, 2, 4, 3, 5, 1).reshape(B, P, ps * ps * C)
    K_pad = params["patch_w"].shape[0]
    if K_pad != patches.shape[-1]:
        patches = jnp.pad(patches, ((0, 0), (0, 0), (0, K_pad - patches.shape[-1])))
    patches = patches.astype(jnp.bfloat16)

    x = patch_embed(patches, params["patch_w"], params["patch_b"], params["pos_emb"])
    x = encoder_stack(x, params, num_heads=config["num_attention_heads"],
                      eps=config["layer_norm_eps"])
    x = post_layernorm(x, params["post_ln_g"], params["post_ln_b"],
                       eps=config["layer_norm_eps"])
    return x


# --------------------------- pure-JAX reference ---------------------------------
# Mirrors the kernel numerics (bf16 MXU operands, f32 accumulation, f32 LN /
# softmax / gelu / residuals, bf16 inter-layer activations, scale folded into
# the prepared wqkv/bqkv).  The only intentional deltas are exact softmax
# division (kernel uses approx EUP reciprocal) and accumulation order.

def reference_forward(images, params, config):
    bf16 = jnp.bfloat16
    B, C, H, W = images.shape
    ps = config["patch_size"]
    nh = config["num_attention_heads"]
    eps = config["layer_norm_eps"]
    gh, gw = H // ps, W // ps
    P = gh * gw
    patches = images.reshape(B, C, gh, ps, gw, ps)
    patches = patches.transpose(0, 2, 4, 3, 5, 1).reshape(B, P, ps * ps * C)
    K_pad = params["patch_w"].shape[0]
    if K_pad != patches.shape[-1]:
        patches = jnp.pad(patches, ((0, 0), (0, 0), (0, K_pad - patches.shape[-1])))
    x = jnp.dot(patches.astype(bf16), params["patch_w"],
                preferred_element_type=jnp.float32)
    x = (x + params["patch_b"] + params["pos_emb"]).astype(bf16)
    D = params["patch_w"].shape[1]
    dh = D // nh
    L = params["wqkv"].shape[0]
    for l in range(L):
        xf = x.astype(jnp.float32)
        res = xf
        h = _layernorm(xf, params["ln1_g"][l], params["ln1_b"][l], eps)
        qkv = jnp.dot(h.astype(bf16), params["wqkv"][l],
                      preferred_element_type=jnp.float32) + params["bqkv"][l]
        q = qkv[..., 0 * D:1 * D].reshape(B, P, nh, dh)   # q already pre-scaled
        k = qkv[..., 1 * D:2 * D].reshape(B, P, nh, dh)
        v = qkv[..., 2 * D:3 * D].reshape(B, P, nh, dh)
        s = jnp.einsum("bqhd,bkhd->bhqk", q.astype(bf16), k.astype(bf16),
                       preferred_element_type=jnp.float32)
        s = s - jnp.max(s, axis=-1, keepdims=True)
        p = jnp.exp(s)
        p = p / jnp.sum(p, axis=-1, keepdims=True)
        ctx = jnp.einsum("bhqk,bkhd->bqhd", p.astype(bf16), v.astype(bf16),
                         preferred_element_type=jnp.float32).reshape(B, P, D)
        xf = jnp.dot(ctx.astype(bf16), params["wo"][l],
                     preferred_element_type=jnp.float32) + params["bo"][l] + res
        res = xf
        h = _layernorm(xf, params["ln2_g"][l], params["ln2_b"][l], eps)
        h = jnp.dot(h.astype(bf16), params["w1"][l],
                    preferred_element_type=jnp.float32) + params["b1"][l]
        h = _gelu_tanh(h)
        xf = jnp.dot(h.astype(bf16), params["w2"][l],
                     preferred_element_type=jnp.float32) + params["b2"][l] + res
        x = xf.astype(bf16)
    xf = x.astype(jnp.float32)
    return _layernorm(xf, params["post_ln_g"], params["post_ln_b"], eps)


# ------------------------------ param init / prep --------------------------------

def init_params(key, config):
    D = config["hidden_size"]
    I = config["intermediate_size"]
    C = config["num_channels"]
    ps = config["patch_size"]
    L = config["num_hidden_layers"]
    P = (config["image_size"] // ps) ** 2
    K = C * ps * ps
    bf16, f32 = jnp.bfloat16, jnp.float32

    def nrm(k, shape, dtype, scale=0.02):
        return (scale * jax.random.normal(k, shape)).astype(dtype)

    ks = iter(jax.random.split(key, 16))
    return {
        "patch_w": nrm(next(ks), (K, D), bf16),      # conv weight, rows = (ph, pw, c)
        "patch_b": nrm(next(ks), (1, D), f32),
        "pos_emb": nrm(next(ks), (P, D), f32),
        "post_ln_g": jnp.ones((1, D), f32),
        "post_ln_b": jnp.zeros((1, D), f32),
        # per-layer params stacked along a leading L axis (grid-indexed by layer)
        "ln1_g": jnp.ones((L, 1, D), f32),
        "ln1_b": jnp.zeros((L, 1, D), f32),
        "wqkv": nrm(next(ks), (L, D, 3 * D), bf16),
        "bqkv": nrm(next(ks), (L, 1, 3 * D), f32),
        "wo": nrm(next(ks), (L, D, D), bf16),
        "bo": nrm(next(ks), (L, 1, D), f32),
        "ln2_g": jnp.ones((L, 1, D), f32),
        "ln2_b": jnp.zeros((L, 1, D), f32),
        "w1": nrm(next(ks), (L, D, I), bf16),
        "b1": nrm(next(ks), (L, 1, I), f32),
        "w2": nrm(next(ks), (L, I, D), bf16),
        "b2": nrm(next(ks), (L, 1, D), f32),
    }


def prepare_params(params, config):
    """Fold the 1/sqrt(dh) attention scale into the q columns of wqkv/bqkv and pad
    the patch-embed contraction dim to a multiple of 128."""
    D = config["hidden_size"]
    nh = config["num_attention_heads"]
    assert D % nh == 0, "hidden_size must be divisible by num_attention_heads"
    scale = 1.0 / math.sqrt(D // nh)
    p = dict(params)
    wqkv = params["wqkv"].astype(jnp.float32)
    p["wqkv"] = wqkv.at[..., :D].multiply(scale).astype(jnp.bfloat16)
    p["bqkv"] = params["bqkv"].at[..., :D].multiply(scale)
    K = params["patch_w"].shape[0]
    K_pad = _round_up(K, 128)
    if K_pad != K:
        p["patch_w"] = jnp.pad(params["patch_w"], ((0, K_pad - K), (0, 0)))
    return p


# ---------------------------------- main ------------------------------------------

if __name__ == "__main__":
    config = dict(
        hidden_size=32,
        intermediate_size=64,
        num_hidden_layers=2,
        num_attention_heads=4,
        num_channels=3,
        image_size=16,
        patch_size=4,
        layer_norm_eps=1e-6,
    )
    key = jax.random.PRNGKey(0)
    k_img, k_par = jax.random.split(key)
    B = 2
    images = jax.random.normal(
        k_img, (B, config["num_channels"], config["image_size"], config["image_size"]),
        dtype=jnp.float32)
    params = prepare_params(init_params(k_par, config), config)

    out = jax.block_until_ready(siglip_vision_forward(images, params, config))
    ref = jax.block_until_ready(reference_forward(images, params, config))
    # tolerance covers approx-EUP reciprocal in softmax + accumulation-order deltas
    np.testing.assert_allclose(np.asarray(out), np.asarray(ref), atol=1e-2, rtol=1e-2)

    print("KERNEL_OK")
</pallas_src>

<mosaic_0001>
module attributes {stable_mosaic.version = 11 : i64} {
  func.func @_patch_embed_kernel(%arg0: i32, %arg1: i32, %arg2: memref<1x16x128xbf16, #tpu.memory_space<vmem>>, %arg3: memref<128x32xbf16, #tpu.memory_space<vmem>>, %arg4: memref<1x32xf32, #tpu.memory_space<vmem>>, %arg5: memref<16x32xf32, #tpu.memory_space<vmem>>, %arg6: memref<1x16x32xbf16, #tpu.memory_space<vmem>>) attributes {dimension_semantics = [#tpu.dimension_semantics<parallel>, #tpu.dimension_semantics<parallel>], iteration_bounds = array<i64: 2, 1>, scalar_prefetch = 0 : i64, scratch_operands = 0 : i64, tpu.core_type = #tpu.core_type<tc>, window_params = [{transform_indices = @transform_0, window_bounds = array<i64: 1, 16, 128>}, {pipeline_mode = #tpu.pipeline_mode<synchronous>, transform_indices = @transform_1, window_bounds = array<i64: 128, 32>}, {pipeline_mode = #tpu.pipeline_mode<synchronous>, transform_indices = @transform_2, window_bounds = array<i64: 1, 32>}, {transform_indices = @transform_3, window_bounds = array<i64: 16, 32>}, {transform_indices = @transform_4, window_bounds = array<i64: 1, 16, 32>}]} {
    %c0 = arith.constant 0 : index
    %c0_0 = arith.constant 0 : index
    %c0_1 = arith.constant 0 : index
    %0 = vector.load %arg2[%c0, %c0_0, %c0_1] : memref<1x16x128xbf16, #tpu.memory_space<vmem>>, vector<1x16x128xbf16>
    %1 = vector.shape_cast %0 : vector<1x16x128xbf16> to vector<16x128xbf16>
    %c0_2 = arith.constant 0 : index
    %c0_3 = arith.constant 0 : index
    %2 = vector.load %arg3[%c0_2, %c0_3] : memref<128x32xbf16, #tpu.memory_space<vmem>>, vector<128x32xbf16>
    %cst = arith.constant dense<0.000000e+00> : vector<16x32xf32>
    %3 = tpu.matmul %1, %2, %cst {dimension_numbers = #tpu.dot_dimension_numbers<[1], [0], [0], [1], [0, 0, 1, 1], [], []>} : vector<16x128xbf16>, vector<128x32xbf16>, vector<16x32xf32> -> vector<16x32xf32>
    %c0_4 = arith.constant 0 : index
    %c0_5 = arith.constant 0 : index
    %4 = vector.load %arg4[%c0_4, %c0_5] : memref<1x32xf32, #tpu.memory_space<vmem>>, vector<1x32xf32>
    %5 = vector.broadcast %4 : vector<1x32xf32> to vector<16x32xf32>
    %6 = arith.addf %3, %5 : vector<16x32xf32>
    %c0_6 = arith.constant 0 : index
    %c0_7 = arith.constant 0 : index
    %7 = vector.load %arg5[%c0_6, %c0_7] : memref<16x32xf32, #tpu.memory_space<vmem>>, vector<16x32xf32>
    %8 = arith.addf %6, %7 : vector<16x32xf32>
    %9 = arith.truncf %8 : vector<16x32xf32> to vector<16x32xbf16>
    %c0_8 = arith.constant 0 : index
    %c0_9 = arith.constant 0 : index
    %c0_10 = arith.constant 0 : index
    %10 = vector.load %arg6[%c0_8, %c0_9, %c0_10] : memref<1x16x32xbf16, #tpu.memory_space<vmem>>, vector<1x16x32xbf16>
    %11 = vector.shape_cast %10 : vector<1x16x32xbf16> to vector<16x32xbf16>
    %12 = vector.shape_cast %9 : vector<16x32xbf16> to vector<1x16x32xbf16>
    tpu.vector_store %arg6[%c0_8, %c0_9, %c0_10], %12 {strides = array<i32>} : memref<1x16x32xbf16, #tpu.memory_space<vmem>>, vector<1x16x32xbf16>,
    return
  }
  func.func @transform_0(%arg0: i32, %arg1: i32) -> (i32, i32, i32) {
    %c0_i32 = arith.constant 0 : i32
    %c0_i32_0 = arith.constant 0 : i32
    return %arg0, %arg1, %c0_i32 : i32, i32, i32
  }
  func.func @transform_1(%arg0: i32, %arg1: i32) -> (i32, i32) {
    %c0_i32 = arith.constant 0 : i32
    %c0_i32_0 = arith.constant 0 : i32
    %c0_i32_1 = arith.constant 0 : i32
    return %c0_i32, %c0_i32_0 : i32, i32
  }
  func.func @transform_2(%arg0: i32, %arg1: i32) -> (i32, i32) {
    %c0_i32 = arith.constant 0 : i32
    %c0_i32_0 = arith.constant 0 : i32
    %c0_i32_1 = arith.constant 0 : i32
    return %c0_i32, %c0_i32_0 : i32, i32
  }
  func.func @transform_3(%arg0: i32, %arg1: i32) -> (i32, i32) {
    %c0_i32 = arith.constant 0 : i32
    %c0_i32_0 = arith.constant 0 : i32
    return %arg1, %c0_i32 : i32, i32
  }
  func.func @transform_4(%arg0: i32, %arg1: i32) -> (i32, i32, i32) {
    %c0_i32 = arith.constant 0 : i32
    %c0_i32_0 = arith.constant 0 : i32
    return %arg0, %arg1, %c0_i32 : i32, i32, i32
  }
}

</mosaic_0001>

<llo_original>
// kernel: tpu_custom_call.1
$region0: #{tpu_custom_call.1}
  #allocation0 [shape = 'u32[]', space=smem, size = 0x4, offset = 0x4, fixed_abs, tag = 'smem constant byte address 0x4 - core index']
  #allocation1 [shape = 'u32[144,128]{1,0:T(1,128)}', space=vmem, size = 0x12000, scoped, tag = 'internal scratch']
  %s0 = inlined_call_operand.hbm [shape: bf16[2,16,128], index: 0, kind: input, shape index: {}]
  %s1 = inlined_call_operand.hbm [shape: bf16[128,32], index: 1, kind: input, shape index: {}]
  %s2 = inlined_call_operand.hbm [shape: f32[1,32], index: 2, kind: input, shape index: {}]
  %s3 = inlined_call_operand.hbm [shape: f32[16,32], index: 3, kind: input, shape index: {}]
  %s4 = inlined_call_operand.hbm [shape: bf16[2,16,32], index: 4, kind: output, shape index: {}]
  %s5 = sld [smem:[#allocation0]]
  $region65: #{tpu_custom_call.1} parent=0
    _
  %s7 = ssub.s32 1, %s5
  %s8 = scalar_select 0, %s7, %s5
  $region1: #{tpu_custom_call.1} parent=0
    #allocation2 [shape = 'u8[8192]{0}', space=vmem, size = 0x2000, scoped, tag = 'input window, operand 0']
    #allocation3 [shape = 's32[2]{0}', space=sflag, size = 0x8, scoped, tag = 'scoped memory for tpu_custom_call.1']
    #allocation4 [shape = 's32[2]{0}', space=sflag, size = 0x8, scoped, tag = 'scoped memory for tpu_custom_call.1']
    #allocation5 [shape = 'u8[32768]{0}', space=vmem, size = 0x8000, scoped, tag = 'input window, operand 1, single buffered']
    #allocation6 [shape = 's32[1]{0}', space=sflag, size = 0x4, scoped, tag = 'scoped memory for tpu_custom_call.1']
    #allocation7 [shape = 'u8[512]{0}', space=vmem, size = 0x400, scoped, tag = 'input window, operand 2, single buffered']
    #allocation8 [shape = 'u8[8192]{0}', space=vmem, size = 0x2000, scoped, tag = 'input window, operand 3, single buffered']
    #allocation9 [shape = 's32[1]{0}', space=sflag, size = 0x4, scoped, tag = 'scoped memory for tpu_custom_call.1']
    #allocation10 [shape = 'u8[8192]{0}', space=vmem, size = 0x2000, scoped, tag = 'output window, operand 0']
    %9 = vsyncpa [#allocation3], 0
    %s10 = scalar_lea.sflag [#allocation3], 1
    %11 = vsyncpa %s10, 0
    %12 = vsyncpa [#allocation6], 0
    %13 = vsyncpa [#allocation9], 0
    %14 = vsyncpa [#allocation4], 0
    %s15 = scalar_lea.sflag [#allocation4], 1
    %16 = vsyncpa %s15, 0
    loop: start=0, step=1, limit=4
    $region2: #{tpu_custom_call.1} parent=1 // loop_pre_header
      _
    $region3: #{tpu_custom_call.1} parent=1 // loop_header
      %s18 = sphi 0, %s22
      %p19 = scmp.ge.s32.totalorder %s18, 4
      %s25 = sphi 0, %s37
      %s26 = sphi 0, %s33
      %s27 = sphi 0, %s25
      %s28 = sphi 0, %s26
      %s29 = sphi 0, %s27
      %s30 = sphi 0, %s28
      %s42 = sphi 0, %s44
      %s45 = sphi 0, %s42
      %s46 = sphi 0, %s45
      %s62 = sphi 0, %s46
      %s66 = sphi 0, %s66
      %s68 = sphi 0, %s66
      %s69 = sphi 0, %s68
      %s83 = sphi 0, %s69
      %s87 = sphi 0, %s87
      %s89 = sphi 0, %s87
      %s90 = sphi 0, %s89
      %s104 = sphi 0, %s90
      %s110 = sphi 0, %s112
      %s113 = sphi 0, %s110
      %s114 = sphi 0, %s113
      %s130 = sphi 0, %s114
      %s138 = sphi 0, %s140
      %s141 = sphi 0, %s138
      %s142 = sphi 0, %s141
      %s158 = sphi 0, %s142
    $region4: #{tpu_custom_call.1} parent=1 // loop_header_branch
      %21 = sbr.rel (%p19) target = $region8
    $region5: #{tpu_custom_call.1} parent=1 // loop_body
      %s23 = ssub.s32 %s18, 1
      %s24 = ssub.s32 %s18, 2
      %s31 = sadd.s32 1, %s26
      %p32 = scmp.ge.s32.totalorder %s31, 1
      %s33 = scalar_select %p32, 0, %s31
      %s34 = sadd.s32 1, %s25
      %s35 = scalar_select %p32, %s34, %s25
      %p36 = scmp.ge.s32.totalorder %s35, 2
      %s37 = scalar_select %p36, 0, %s35
      %s38 = ssub.s32 %s25, %s37
      %s39 = ssub.s32 %s26, %s33
      %s40 = sor.u32 %s38, %s39
      %p41 = scmp.eq.s32.totalorder %s40, 0
      %s43 = sadd.s32 %s42, 1
      %s44 = scalar_select %p41, %s42, %s43
      %p47 = pneg %p41
      %p48 = scmp.eq.s32.totalorder %s18, 1
      %p49 = por %p47, %p48
      %p50 = scmp.ne.s32.totalorder %s42, %s45
      %p51 = scmp.eq.s32.totalorder %s18, 0
      %p52 = por %p50, %p51
      %p53 = scmp.ne.s32.totalorder %s42, %s45
      %p54 = scmp.eq.s32.totalorder %s23, 1
      %p55 = por %p53, %p54
      %p56 = scmp.ne.s32.totalorder %s45, %s46
      %p57 = scmp.eq.s32.totalorder %s23, 0
      %p58 = por %p56, %p57
      %p59 = scmp.ne.s32.totalorder %s45, %s46
      %p60 = scmp.eq.s32.totalorder %s24, 1
      %p61 = por %p59, %p60
      %p63 = scmp.ne.s32.totalorder %s46, %s62
      %p64 = scmp.eq.s32.totalorder %s24, 0
      %p65 = por %p63, %p64
      %s67 = sadd.s32 %s66, 1
      %p70 = scmp.eq.s32.totalorder %s18, 1
      %p71 = scmp.ne.s32.totalorder %s66, %s68
      %p72 = scmp.eq.s32.totalorder %s18, 0
      %p73 = por %p71, %p72
      %p74 = scmp.ne.s32.totalorder %s66, %s68
      %p75 = scmp.eq.s32.totalorder %s23, 1
      %p76 = por %p74, %p75
      %p77 = scmp.ne.s32.totalorder %s68, %s69
      %p78 = scmp.eq.s32.totalorder %s23, 0
      %p79 = por %p77, %p78
      %p80 = scmp.ne.s32.totalorder %s68, %s69
      %p81 = scmp.eq.s32.totalorder %s24, 1
      %p82 = por %p80, %p81
      %p84 = scmp.ne.s32.totalorder %s69, %s83
      %p85 = scmp.eq.s32.totalorder %s24, 0
      %p86 = por %p84, %p85
      %s88 = sadd.s32 %s87, 1
      %p91 = scmp.eq.s32.totalorder %s18, 1
      %p92 = scmp.ne.s32.totalorder %s87, %s89
      %p93 = scmp.eq.s32.totalorder %s18, 0
      %p94 = por %p92, %p93
      %p95 = scmp.ne.s32.totalorder %s87, %s89
      %p96 = scmp.eq.s32.totalorder %s23, 1
      %p97 = por %p95, %p96
      %p98 = scmp.ne.s32.totalorder %s89, %s90
      %p99 = scmp.eq.s32.totalorder %s23, 0
      %p100 = por %p98, %p99
      %p101 = scmp.ne.s32.totalorder %s89, %s90
      %p102 = scmp.eq.s32.totalorder %s24, 1
      %p103 = por %p101, %p102
      %p105 = scmp.ne.s32.totalorder %s90, %s104
      %p106 = scmp.eq.s32.totalorder %s24, 0
      %p107 = por %p105, %p106
      %s108 = ssub.s32 %s26, %s33
      %p109 = scmp.eq.s32.totalorder %s108, 0
      %s111 = sadd.s32 %s110, 1
      %s112 = scalar_select %p109, %s110, %s111
      %p115 = pneg %p109
      %p116 = scmp.eq.s32.totalorder %s18, 1
      %p117 = por %p115, %p116
      %p118 = scmp.ne.s32.totalorder %s110, %s113
      %p119 = scmp.eq.s32.totalorder %s18, 0
      %p120 = por %p118, %p119
      %p121 = scmp.ne.s32.totalorder %s110, %s113
      %p122 = scmp.eq.s32.totalorder %s23, 1
      %p123 = por %p121, %p122
      %p124 = scmp.ne.s32.totalorder %s113, %s114
      %p125 = scmp.eq.s32.totalorder %s23, 0
      %p126 = por %p124, %p125
      %p127 = scmp.ne.s32.totalorder %s113, %s114
      %p128 = scmp.eq.s32.totalorder %s24, 1
      %p129 = por %p127, %p128
      %p131 = scmp.ne.s32.totalorder %s114, %s130
      %p132 = scmp.eq.s32.totalorder %s24, 0
      %p133 = por %p131, %p132
      %s134 = ssub.s32 %s25, %s37
      %s135 = ssub.s32 %s26, %s33
      %s136 = sor.u32 %s134, %s135
      %p137 = scmp.eq.s32.totalorder %s136, 0
      %s139 = sadd.s32 %s138, 1
      %s140 = scalar_select %p137, %s138, %s139
      %p143 = pneg %p137
      %p144 = scmp.eq.s32.totalorder %s18, 1
      %p145 = por %p143, %p144
      %p146 = scmp.ne.s32.totalorder %s138, %s141
      %p147 = scmp.eq.s32.totalorder %s18, 0
      %p148 = por %p146, %p147
      %p149 = scmp.ne.s32.totalorder %s138, %s141
      %p150 = scmp.eq.s32.totalorder %s23, 1
      %p151 = por %p149, %p150
      %p152 = scmp.ne.s32.totalorder %s141, %s142
      %p153 = scmp.eq.s32.totalorder %s23, 0
      %p154 = por %p152, %p153
      %p155 = scmp.ne.s32.totalorder %s141, %s142
      %p156 = scmp.eq.s32.totalorder %s24, 1
      %p157 = por %p155, %p156
      %p159 = scmp.ne.s32.totalorder %s142, %s158
      %p160 = scmp.eq.s32.totalorder %s24, 0
      %p161 = por %p159, %p160
      %p162 = scmp.le.s32.totalorder 1, %s18
      %p163 = scmp.lt.s32.totalorder %s18, 3
      %p164 = pnand %p162, %p163
      %p165 = pneg %p164
      // Predicated region
      $region9: #{tpu_custom_call.1} parent=5 // pred_check
        _
      $region10: #{tpu_custom_call.1} parent=5 // pred_check_branch
        %167 = sbr.rel (%p164) target = $region12
      $region11: #{tpu_custom_call.1} parent=5 // pred_region
        %s168 = ssub.s32 %s18, 1
        // Predicated region
        $region13: #{tpu_custom_call.1} parent=11 // pred_check
          %p169 = pneg %p79
        $region14: #{tpu_custom_call.1} parent=11 // pred_check_branch
          %171 = sbr.rel (%p169) target = $region16
        $region15: #{tpu_custom_call.1} parent=11 // pred_region
          %s173 = ssub.s32 1024, 1024
          %174 = vsyncadd [#allocation6], %s173
          %s175 = sshll.u32 [#allocation5], 4
          %s176 = int_to_ptr.vmem [resolvable:$true] %s175
          %181 = dma.hbm_to_vmem [thread:$0]  %s1, 1024, %s176, [#allocation6], 64, 64, 4
        $region16: #{tpu_custom_call.1} parent=11 // pred_fallthru
          _
        // Predicated region
        $region17: #{tpu_custom_call.1} parent=11 // pred_check
          %p182 = pneg %p100
        $region18: #{tpu_custom_call.1} parent=11 // pred_check_branch
          %184 = sbr.rel (%p182) target = $region20
        $region19: #{tpu_custom_call.1} parent=11 // pred_region
          %s186 = ssub.s32 16, 16
          %187 = vsyncadd [#allocation6], %s186
          %s189 = sshll.u32 [#allocation7], 4
          %s190 = int_to_ptr.vmem [resolvable:$true] %s189
          %192 = dma.hbm_to_vmem [thread:$0]  %s2, 16, %s190, [#allocation6]
        $region20: #{tpu_custom_call.1} parent=11 // pred_fallthru
          _
        // Predicated region
        $region21: #{tpu_custom_call.1} parent=11 // pred_check
          %p193 = pneg %p126
        $region22: #{tpu_custom_call.1} parent=11 // pred_check_branch
          %195 = sbr.rel (%p193) target = $region24
        $region23: #{tpu_custom_call.1} parent=11 // pred_region
          %s196 = smul.u32 2, %s28
          %s198 = ssub.s32 256, 256
          %199 = vsyncadd [#allocation9], %s198
          %s200 = smul.addr %s196, 128
          %s201 = scalar_lea.hbm %s3, %s200
          %s202 = sshll.u32 [#allocation8], 4
          %s203 = int_to_ptr.vmem [resolvable:$true] %s202
          %208 = dma.hbm_to_vmem [thread:$0]  %s201, 256, %s203, [#allocation9], 128, 128, 8
        $region24: #{tpu_custom_call.1} parent=11 // pred_fallthru
          _
      $region12: #{tpu_custom_call.1} parent=5 // pred_fallthru
        _
      %p209 = scmp.lt.s32.totalorder %s18, 2
      // Predicated region
      $region25: #{tpu_custom_call.1} parent=5 // pred_check
        %p210 = pneg %p209
      $region26: #{tpu_custom_call.1} parent=5 // pred_check_branch
        %212 = sbr.rel (%p210) target = $region28
      $region27: #{tpu_custom_call.1} parent=5 // pred_region
        // Predicated region
        $region29: #{tpu_custom_call.1} parent=27 // pred_check
          %p213 = pneg %p52
        $region30: #{tpu_custom_call.1} parent=27 // pred_check_branch
          %215 = sbr.rel (%p213) target = $region32
        $region31: #{tpu_custom_call.1} parent=27 // pred_region
          %s216 = sand.u32 %s42, 1
          %s217 = scalar_lea.sflag [#allocation3], %s216
          %s218 = sand.u32 %s42, 1
          %s219 = smul.addr %s218, 8
          %s220 = scalar_lea.vmem [#allocation2], %s219
          %s221 = smul.u32 2, %s26
          %s223 = ssub.s32 128, 128
          %224 = vsyncadd %s217, %s223
          %s225 = smul.addr %s25, 2
          %s226 = sadd.s32 %s221, %s225
          %s227 = smul.addr %s226, 64
          %s228 = scalar_lea.hbm %s0, %s227
          %s229 = sshll.u32 %s220, 4
          %s230 = int_to_ptr.vmem [resolvable:$true] %s229
          %235 = dma.hbm_to_vmem [thread:$0]  %s228, 128, %s230, %s217, 64, 64, 4
        $region32: #{tpu_custom_call.1} parent=27 // pred_fallthru
          _
      $region28: #{tpu_custom_call.1} parent=5 // pred_fallthru
        _
      %p236 = scmp.le.s32.totalorder 1, %s18
      %p237 = scmp.lt.s32.totalorder %s18, 3
      %p238 = pnand %p236, %p237
      %p239 = pneg %p238
      // Predicated region
      $region33: #{tpu_custom_call.1} parent=5 // pred_check
        _
      $region34: #{tpu_custom_call.1} parent=5 // pred_check_branch
        %241 = sbr.rel (%p238) target = $region36
      $region35: #{tpu_custom_call.1} parent=5 // pred_region
        %s242 = ssub.s32 %s18, 1
        %s243 = sand.u32 %s45, 1
        %s244 = scalar_lea.sflag [#allocation3], %s243
        %s245 = sand.u32 %s45, 1
        %s246 = smul.addr %s245, 8
        %s247 = scalar_lea.vmem [#allocation2], %s246
        // Predicated region
        $region37: #{tpu_custom_call.1} parent=35 // pred_check
          %p248 = pneg %p58
        $region38: #{tpu_custom_call.1} parent=35 // pred_check_branch
          %250 = sbr.rel (%p248) target = $region40
        $region39: #{tpu_custom_call.1} parent=35 // pred_region
          %251 = dma.done %s244, 128
        $region40: #{tpu_custom_call.1} parent=35 // pred_fallthru
          _
        // Predicated region
        $region41: #{tpu_custom_call.1} parent=35 // pred_check
          %p252 = pneg %p79
        $region42: #{tpu_custom_call.1} parent=35 // pred_check_branch
          %254 = sbr.rel (%p252) target = $region44
        $region43: #{tpu_custom_call.1} parent=35 // pred_region
          %255 = dma.done [#allocation6], 1024
        $region44: #{tpu_custom_call.1} parent=35 // pred_fallthru
          _
        // Predicated region
        $region45: #{tpu_custom_call.1} parent=35 // pred_check
          %p256 = pneg %p100
        $region46: #{tpu_custom_call.1} parent=35 // pred_check_branch
          %258 = sbr.rel (%p256) target = $region48
        $region47: #{tpu_custom_call.1} parent=35 // pred_region
          %259 = dma.done [#allocation6], 16
        $region48: #{tpu_custom_call.1} parent=35 // pred_fallthru
          _
        // Predicated region
        $region49: #{tpu_custom_call.1} parent=35 // pred_check
          %p260 = pneg %p126
        $region50: #{tpu_custom_call.1} parent=35 // pred_check_branch
          %262 = sbr.rel (%p260) target = $region52
        $region51: #{tpu_custom_call.1} parent=35 // pred_region
          %263 = dma.done [#allocation9], 256
        $region52: #{tpu_custom_call.1} parent=35 // pred_fallthru
          _
        %s264 = sand.u32 %s45, 1
        %s265 = scalar_lea.sflag [#allocation3], %s264
        %s266 = sand.u32 %s45, 1
        %s267 = smul.addr %s266, 8
        %s268 = scalar_lea.vmem [#allocation2], %s267
        %p269 = pneg %p58
        %p270 = pneg %p55
        %p271 = pneg %p79
        %p272 = pneg %p76
        %p273 = pneg %p100
        %p274 = pneg %p97
        %p275 = pneg %p126
        %p276 = pneg %p123
        %p277 = pneg %p154
        %p278 = pneg %p151
        %s279 = sand.u32 %s141, 1
        %s280 = scalar_lea.sflag [#allocation4], %s279
        %s281 = sand.u32 %s141, 1
        %s282 = smul.addr %s281, 8
        %s283 = scalar_lea.vmem [#allocation10], %s282
        %s284 = smul.u32 2, %s28
        %s285 = smul.u32 2, %s28
        %s286 = smul.u32 2, %s28
        %v288 = vld [vmem:[%s247] sm:$0xf]
        %v289 = vld [vmem:[%s247 + $0x4] sm:$0xf]
        %v290 = vld [vmem:[#allocation5] sm:$0xf]
        %v291 = vld [vmem:[#allocation5 + $0x4] sm:$0xf]
        %v292 = vld [vmem:[#allocation5 + $0x8] sm:$0xf]
        %v293 = vld [vmem:[#allocation5 + $0xc] sm:$0xf]
        %v294 = vld [vmem:[#allocation5 + $0x10] sm:$0xf]
        %v295 = vld [vmem:[#allocation5 + $0x14] sm:$0xf]
        %v296 = vld [vmem:[#allocation5 + $0x18] sm:$0xf]
        %v297 = vld [vmem:[#allocation5 + $0x1c] sm:$0xf]
        %v298 = vld [vmem:[#allocation5 + $0x20] sm:$0xf]
        %v299 = vld [vmem:[#allocation5 + $0x24] sm:$0xf]
        %v300 = vld [vmem:[#allocation5 + $0x28] sm:$0xf]
        %v301 = vld [vmem:[#allocation5 + $0x2c] sm:$0xf]
        %v302 = vld [vmem:[#allocation5 + $0x30] sm:$0xf]
        %v303 = vld [vmem:[#allocation5 + $0x34] sm:$0xf]
        %v304 = vld [vmem:[#allocation5 + $0x38] sm:$0xf]
        %v305 = vld [vmem:[#allocation5 + $0x3c] sm:$0xf]
        %v306 = vld [vmem:[#allocation7] sm:$0x1]
        %v308 = vlaneseq
        %v309 = vshrl.u32 %v308, 7
        %v310 = vsub.s32 0, %v309
        %v311 = vrot.slane %v306, %v310
        %v315 = vunpack.c.l.b16 %v288
        %v316 = vunpack.c.l.b16 %v289
        %v317 = vpack.c.b16 %v316, %v315
        %v335 = vunpack.c.l.b16 %v290
        %v336 = vunpack.c.l.b16 %v291
        %v337 = vunpack.c.l.b16 %v292
        %v338 = vunpack.c.l.b16 %v293
        %v339 = vunpack.c.l.b16 %v294
        %v340 = vunpack.c.l.b16 %v295
        %v341 = vunpack.c.l.b16 %v296
        %v342 = vunpack.c.l.b16 %v297
        %v343 = vunpack.c.l.b16 %v298
        %v344 = vunpack.c.l.b16 %v299
        %v345 = vunpack.c.l.b16 %v300
        %v346 = vunpack.c.l.b16 %v301
        %v347 = vunpack.c.l.b16 %v302
        %v348 = vunpack.c.l.b16 %v303
        %v349 = vunpack.c.l.b16 %v304
        %v350 = vunpack.c.l.b16 %v305
        %v351 = vpack.c.b16 %v336, %v335
        %v352 = vpack.c.b16 %v338, %v337
        %v353 = vpack.c.b16 %v340, %v339
        %v354 = vpack.c.b16 %v342, %v341
        %v355 = vpack.c.b16 %v344, %v343
        %v356 = vpack.c.b16 %v346, %v345
        %v357 = vpack.c.b16 %v348, %v347
        %v358 = vpack.c.b16 %v350, %v349
        %367 = vmatprep.subr.bf16.mxu0 0
        %368 = vmatpush1.bf16.msra.mxu0 %v351
        %369 = vmatprep.subr.bf16.mxu0 0
        %370 = vmatpush1.bf16.msra.mxu0 %v352
        %371 = vmatprep.subr.bf16.mxu0 0
        %372 = vmatpush1.bf16.msra.mxu0 %v353
        %373 = vmatprep.subr.bf16.mxu0 0
        %374 = vmatpush1.bf16.msra.mxu0 %v354
        %375 = vmatprep.subr.bf16.mxu0 0
        %376 = vmatpush1.bf16.msra.mxu0 %v355
        %377 = vmatprep.subr.bf16.mxu0 0
        %378 = vmatpush1.bf16.msra.mxu0 %v356
        %379 = vmatprep.subr.bf16.mxu0 0
        %380 = vmatpush1.bf16.msra.mxu0 %v357
        %381 = vmatprep.subr.bf16.mxu0 0
        %382 = vmatpush1.bf16.msra.mxu0 %v358
        %383 = vmatprep.subr.bf16.mxu0 0
        %384 = vmatpush1.bf16.msra.mxu0 0
        %385 = vmatprep.subr.bf16.mxu0 0
        %386 = vmatpush1.bf16.msra.mxu0 0
        %387 = vmatprep.subr.bf16.mxu0 0
        %388 = vmatpush1.bf16.msra.mxu0 0
        %389 = vmatprep.subr.bf16.mxu0 0
        %390 = vmatpush1.bf16.msra.mxu0 0
        %391 = vmatprep.subr.bf16.mxu0 0
        %392 = vmatpush1.bf16.msra.mxu0 0
        %393 = vmatprep.subr.bf16.mxu0 0
        %394 = vmatpush1.bf16.msra.mxu0 0
        %395 = vmatprep.subr.bf16.mxu0 0
        %396 = vmatpush1.bf16.msra.mxu0 0
        %397 = vmatprep.subr.bf16.mxu0 0
        %398 = vmatpush1.bf16.msra.mxu0 0
        %399 = vmatprep.mubr.bf16.mxu0 0
        %400 = vmatmul.mubr.bf16.gmra.mrb[0].mxu0 %v317
        %v401 = vpop.f32.mrb[0].mxu0
        %v402 = vadd.f32 %v311, %v401
        %v403 = vpop.f32.mrb[0].mxu0
        %v404 = vpop.f32.mrb[0].mxu0
        %v405 = vadd.f32 %v311, %v404
        %v406 = vpop.f32.mrb[0].mxu0
        %407 = vdwg.mxu0
        %v408 = vld [vmem:[#allocation8] sm:$0xff]
        %v409 = vld [vmem:[#allocation8 + $0x8] sm:$0xff]
        %v410 = vadd.f32 %v402, %v408
        %v411 = vadd.f32 %v405, %v409
        %v412 = vpack.c.bf16 %v411, %v410
        %v414 = vunpack.c.l.b16 %v412
        %v415 = vunpack.c.h.b16 %v412
        %v416 = vpack.c.b16 %v414, %v414
        %v417 = vpack.c.b16 %v415, %v415
        %vm420 = vcmask 257024
        %421 = vst.msk [vmem:[%s283] sm:$0xf] %vm420, %v416
        %422 = vst.msk [vmem:[%s283 + $0x4] sm:$0xf] %vm420, %v417
        %s423 = sand.u32 %s141, 1
        %s424 = scalar_lea.sflag [#allocation4], %s423
        %s425 = sand.u32 %s141, 1
        %s426 = smul.addr %s425, 8
        %s427 = scalar_lea.vmem [#allocation10], %s426
        // Predicated region
        $region53: #{tpu_custom_call.1} parent=35 // pred_check
          %p428 = pneg %p151
        $region54: #{tpu_custom_call.1} parent=35 // pred_check_branch
          %430 = sbr.rel (%p428) target = $region56
        $region55: #{tpu_custom_call.1} parent=35 // pred_region
          %s431 = smul.u32 2, %s28
          %s433 = ssub.s32 128, 128
          %434 = vsyncadd %s424, %s433
          %s435 = smul.addr %s27, 2
          %s436 = sadd.s32 %s431, %s435
          %s437 = smul.addr %s436, 64
          %s438 = scalar_lea.hbm %s4, %s437
          %s439 = sshll.u32 %s427, 4
          %s440 = int_to_ptr.vmem [resolvable:$true] %s439
          %445 = dma.vmem_to_hbm [thread:$0]  %s440, 128, %s438, %s424, 64, 64, 4
        $region56: #{tpu_custom_call.1} parent=35 // pred_fallthru
          _
      $region36: #{tpu_custom_call.1} parent=5 // pred_fallthru
        _
      %p446 = scmp.le.s32.totalorder 2, %s18
      // Predicated region
      $region57: #{tpu_custom_call.1} parent=5 // pred_check
        %p447 = pneg %p446
      $region58: #{tpu_custom_call.1} parent=5 // pred_check_branch
        %449 = sbr.rel (%p447) target = $region60
      $region59: #{tpu_custom_call.1} parent=5 // pred_region
        %s450 = ssub.s32 %s18, 2
        // Predicated region
        $region61: #{tpu_custom_call.1} parent=59 // pred_check
          %p451 = pneg %p157
        $region62: #{tpu_custom_call.1} parent=59 // pred_check_branch
          %453 = sbr.rel (%p451) target = $region64
        $region63: #{tpu_custom_call.1} parent=59 // pred_region
          %s454 = sand.u32 %s142, 1
          %s455 = scalar_lea.sflag [#allocation4], %s454
          %s456 = sand.u32 %s142, 1
          %s457 = smul.addr %s456, 8
          %s458 = scalar_lea.vmem [#allocation10], %s457
          %459 = dma.done %s455, 128
        $region64: #{tpu_custom_call.1} parent=59 // pred_fallthru
          _
      $region60: #{tpu_custom_call.1} parent=5 // pred_fallthru
        _
    $region6: #{tpu_custom_call.1} parent=1 // loop_footer
      %s22 = sadd.s32 1, %s18
    $region7: #{tpu_custom_call.1} parent=1 // loop_footer_branch
      %17 = sbr.rel target = $region3
    $region8: #{tpu_custom_call.1} parent=1 // loop_exit
      _
    %460 = vsyncpa [#allocation3], 1
    %s461 = scalar_lea.sflag [#allocation3], 1
    %462 = vsyncpa %s461, 1
    %463 = vsyncpa [#allocation6], 1
    %464 = vsyncpa [#allocation9], 1
    %465 = vsyncpa [#allocation4], 1
    %s466 = scalar_lea.sflag [#allocation4], 1
    %467 = vsyncpa %s466, 1

</llo_original>
